<compile_context>
chip_gen: v5e
topology: v5e:2x2
jax: 0.10.0
libtpu: 0.0.40
codegen_flags: <defaults>
</compile_context>

<pallas_src>
import math
from functools import partial

import jax
import jax.numpy as jnp
from jax.experimental import pallas as pl
from jax.experimental.pallas import tpu as pltpu


def _round_up(x, m):
    return ((x + m - 1) // m) * m


# ---------------------------------------------------------------------------
# Gabor filter bank -> conv weight (plain jnp; tiny, fused by XLA)
# ---------------------------------------------------------------------------
def _gabor_weight(params, kernel_size):
    f_half = params.shape[0]
    sig_lo = 4.0 * math.sqrt(2.0 * math.log(2.0)) / math.pi
    sig_hi = kernel_size * math.sqrt(2.0 * math.log(2.0)) / math.pi
    mu = jnp.clip(params[:, 0].astype(jnp.float32), 0.0, math.pi)[:, None]
    sigma = jnp.clip(params[:, 1].astype(jnp.float32), sig_lo, sig_hi)[:, None]
    t = jnp.arange(-(kernel_size // 2), (kernel_size + 1) // 2,
                   dtype=jnp.float32)[None, :]
    denom = 1.0 / (math.sqrt(2.0 * math.pi) * sigma)
    gauss = jnp.exp(-(t * t) / (2.0 * sigma * sigma))
    real = denom * jnp.cos(mu * t) * gauss
    imag = denom * jnp.sin(mu * t) * gauss
    stacked = jnp.stack([real, imag], axis=1).reshape(2 * f_half, kernel_size)
    return stacked.T.astype(jnp.float32)            # (K_out, wk) = (K, 2F)


# ---------------------------------------------------------------------------
# VMEM budgeting / tile selection
# ---------------------------------------------------------------------------
def _vmem_bytes(l_tile, stride, tb, k_out_pad, wk_pad):
    chunk = l_tile * stride
    return (2 * 4 * tb * (chunk + 128)            # x main + halo (double-buffered)
            + 2 * 4 * tb * k_out_pad * l_tile     # output block (double-buffered)
            + 2 * 4 * k_out_pad * wk_pad          # weight
            + 2 * 4 * l_tile                      # bias
            + 4 * wk_pad * l_tile)                # patch scratch


def _pick_l_tile(l_out, stride, tb, k_out_pad, wk_pad,
                 budget_bytes=24 * 2**20, max_tile=1024):
    """Largest lane-dense tile that fits the (v7x-safe) VMEM budget."""
    cand = min(max_tile, max(128, _round_up(l_out, 128)))
    while cand > 128:
        if _vmem_bytes(cand, stride, tb, k_out_pad, wk_pad) <= budget_bytes:
            return cand
        cand -= 128
    return 128


# ---------------------------------------------------------------------------
# Pallas kernel: conv1d(in_channels=1) over an (8-batch x lane-dense) tile
# ---------------------------------------------------------------------------
def _gabor_conv1d_kernel(*refs, stride, use_bias, wk):
    if use_bias:
        xm_ref, xh_ref, w_ref, b_ref, o_ref, p_scr = refs
    else:
        xm_ref, xh_ref, w_ref, o_ref, p_scr = refs

    tb, k_out_pad, l_tile = o_ref.shape             # (8, K_out_pad, L_TILE)
    wk_pad = p_scr.shape[0]
    wk_c = wk + 1 if use_bias else wk               # contraction rows incl. bias row

    # Halo'd input window for this grid step: (tb, CHUNK + 128).
    x_win = jnp.concatenate([xm_ref[...], xh_ref[...]], axis=1)
    w = w_ref[...]                                  # (K_out_pad, wk_pad), hoisted

    # Constant rows of the patch matrix, written once per grid step:
    #  * row wk       : bias tile (bias folded into the matmul through a
    #                   column of ones in the weight matrix)
    #  * rows >= wk_c : zeros (contraction padding)
    if use_bias:
        p_scr[pl.ds(wk, 1), :] = b_ref[...]         # (1, L_TILE)
    if wk_pad > wk_c:
        p_scr[pl.ds(wk_c, wk_pad - wk_c), :] = jnp.zeros(
            (wk_pad - wk_c, l_tile), jnp.float32)

    span = (l_tile - 1) * stride + 1
    for t in range(tb):                             # static unroll: 8 sublane rows
        # im2col into the patch scratch: P[c, l] = x[t, l*stride + c]
        for c in range(wk):
            if stride == 1:
                row = jax.lax.slice(x_win, (t, c), (t + 1, c + l_tile))
            else:
                # TODO(synk): stride>1 strided lane slice — untested path.
                row = jax.lax.slice(x_win, (t, c), (t + 1, c + span), (1, stride))
            p_scr[pl.ds(c, 1), :] = row
        # Single MXU contraction per batch row:
        #   (K_out_pad, wk_pad) @ (wk_pad, L_TILE) -> (K_out_pad, L_TILE)
        acc = jnp.dot(w, p_scr[...], preferred_element_type=jnp.float32)
        # One dense (sublane/lane-aligned, unmasked) store per batch row.
        o_ref[t, :, :] = acc.astype(o_ref.dtype)


# ---------------------------------------------------------------------------
# Wrapper
# ---------------------------------------------------------------------------
@partial(jax.jit, static_argnames=("kernel_size", "strides", "padding", "use_bias"))
def gabor_conv1d(params, bias, x, *, kernel_size, strides, padding, use_bias):
    B, c_in, L = x.shape
    assert c_in == 1, "F.conv1d weight has in_channels=1 in this module"
    f_half = params.shape[0]
    wk = 2 * f_half                                  # conv receptive width
    k_out = kernel_size                              # conv out_channels (port layout)
    assert wk <= 128, "halo block covers <=128 taps (see TODO)"

    weight = _gabor_weight(params, kernel_size)      # (K_out, wk)

    xs = x[:, 0, :].astype(jnp.float32)              # (B, L)
    if padding:
        xs = jnp.pad(xs, ((0, 0), (padding, padding)))
    L_pad = xs.shape[1]
    assert L_pad >= wk, "input too short for the filter width"
    L_out = (L_pad - wk) // strides + 1

    TB = 8                                           # full-sublane batch tile
    B_pad = _round_up(B, TB)
    k_out_pad = _round_up(k_out, 8)                  # dense sublane stores
    wk_c = wk + (1 if use_bias else 0)               # + bias row
    wk_pad = _round_up(wk_c, 8)

    l_tile = _pick_l_tile(L_out, strides, TB, k_out_pad, wk_pad)
    grid_l = -(-L_out // l_tile)
    L_out_pad = grid_l * l_tile
    chunk = l_tile * strides                         # x lanes consumed per L tile
    halo_blocks = chunk // 128

    LX = max(_round_up(L_pad, 128), grid_l * chunk + 128)
    LX = _round_up(LX, chunk)
    xp = jnp.pad(xs, ((0, B_pad - B), (0, LX - L_pad)))   # zero pad batch + lanes

    # Weight matrix with optional ones column (bias fold) + zero padding.
    cols = [weight]
    if use_bias:
        cols.append(jnp.ones((k_out, 1), jnp.float32))
    w_full = jnp.concatenate(cols, axis=1)           # (K_out, wk_c)
    w_pad = jnp.zeros((k_out_pad, wk_pad), jnp.float32)
    w_pad = w_pad.at[:k_out, :wk_c].set(w_full)

    grid = (B_pad // TB, grid_l)

    in_specs = [
        pl.BlockSpec((TB, chunk), lambda bi, li: (bi, li)),                       # x main
        pl.BlockSpec((TB, 128), lambda bi, li: (bi, (li + 1) * halo_blocks)),     # x halo
        pl.BlockSpec((k_out_pad, wk_pad), lambda bi, li: (0, 0)),                 # weight
    ]
    args = [xp, xp, w_pad]
    if use_bias:
        assert bias is not None and bias.shape[0] == L_out, (
            "torch `outputs += bias` broadcast requires len(bias) == L_out")
        bpad = jnp.pad(bias.astype(jnp.float32), (0, L_out_pad - L_out))
        args.append(bpad.reshape(1, L_out_pad))
        in_specs.append(pl.BlockSpec((1, l_tile), lambda bi, li: (0, li)))

    vmem_need = _vmem_bytes(l_tile, strides, TB, k_out_pad, wk_pad)
    vmem_limit = int(max(32 * 2**20, min(64 * 2**20, vmem_need + (8 << 20))))

    out = pl.pallas_call(
        partial(_gabor_conv1d_kernel, stride=strides, use_bias=use_bias, wk=wk),
        out_shape=jax.ShapeDtypeStruct((B_pad, k_out_pad, L_out_pad), jnp.float32),
        grid=grid,
        in_specs=in_specs,
        out_specs=pl.BlockSpec((TB, k_out_pad, l_tile), lambda bi, li: (bi, 0, li)),
        scratch_shapes=[pltpu.VMEM((wk_pad, l_tile), jnp.float32)],   # patch matrix
        compiler_params=pltpu.CompilerParams(
            dimension_semantics=("parallel", "parallel"),
            vmem_limit_bytes=vmem_limit),
    )(*args)

    return out[:B, :k_out, :L_out]


# ---------------------------------------------------------------------------
# Pure-JAX reference (mirrors the PyTorch forward exactly)
# ---------------------------------------------------------------------------
def reference(params, bias, x, *, kernel_size, strides, padding, use_bias):
    sig_lo = 4.0 * math.sqrt(2.0 * math.log(2.0)) / math.pi
    sig_hi = kernel_size * math.sqrt(2.0 * math.log(2.0)) / math.pi
    mu = jnp.clip(params[:, 0], 0.0, math.pi)[:, None]
    sigma = jnp.clip(params[:, 1], sig_lo, sig_hi)[:, None]
    t = jnp.arange(-(kernel_size // 2), (kernel_size + 1) // 2,
                   dtype=jnp.float32)[None, :]
    denom = 1.0 / (math.sqrt(2.0 * math.pi) * sigma)
    gauss = jnp.exp(-(t * t) / (2.0 * sigma * sigma))
    real = denom * jnp.cos(mu * t) * gauss
    imag = denom * jnp.sin(mu * t) * gauss
    stacked = jnp.stack([real, imag], axis=1).reshape(-1, kernel_size)
    w = stacked.T[:, None, :]                        # (K_out, 1, wk)
    out = jax.lax.conv_general_dilated(
        x.astype(jnp.float32), w, (strides,), [(padding, padding)],
        dimension_numbers=("NCH", "OIH", "NCH"),
        precision=jax.lax.Precision.HIGHEST)
    if use_bias:
        out = out + bias
    return out


if __name__ == "__main__":
    key = jax.random.PRNGKey(0)
    k1, k2, k3, k4, k5, k6, k7 = jax.random.split(key, 7)

    # ---- Config 1: faithful use_bias path (bias broadcast needs L_out == 2*filters//2)
    filters, ksz, strides, padding, use_bias = 8, 16, 1, 0, True
    f_half = filters // 2
    wk = 2 * f_half
    B = 2
    L_out_t = wk
    L = (L_out_t - 1) * strides + wk - 2 * padding          # 15
    mu0 = jnp.array([0.3, 1.2, 2.3, 4.0], dtype=jnp.float32)    # 4.0 clamps to pi
    sig0 = jnp.array([0.5, 2.0, 3.5, 7.0], dtype=jnp.float32)   # 0.5 / 7.0 clamp
    params1 = jnp.stack([mu0, sig0], axis=1)                # (4, 2)
    bias1 = jnp.arange(wk, dtype=jnp.float32) * 0.01        # (8,)
    x1 = jax.random.normal(k1, (B, 1, L), dtype=jnp.float32)

    out1 = jax.block_until_ready(gabor_conv1d(
        params1, bias1, x1, kernel_size=ksz, strides=strides,
        padding=padding, use_bias=use_bias))
    ref1 = reference(params1, bias1, x1, kernel_size=ksz, strides=strides,
                     padding=padding, use_bias=use_bias)
    assert out1.shape == (B, ksz, L_out_t), out1.shape
    err1 = float(jnp.max(jnp.abs(out1 - ref1)))
    assert err1 < 1e-4, f"config-1 mismatch vs reference, max abs err = {err1}"

    # ---- Config 2: no bias; exercises batch tiling (2 batch blocks), padding, halo
    filters2, ksz2, strides2, padding2 = 10, 32, 1, 3
    f_half2 = filters2 // 2
    B2, L2 = 16, 385
    mu2 = jax.random.uniform(k2, (f_half2,), minval=0.0, maxval=math.pi)
    sig2 = jax.random.uniform(k3, (f_half2,), minval=1.0, maxval=8.0)
    params2 = jnp.stack([mu2, sig2], axis=1).astype(jnp.float32)   # (5, 2)
    x2 = jax.random.normal(k4, (B2, 1, L2), dtype=jnp.float32)

    out2 = jax.block_until_ready(gabor_conv1d(
        params2, None, x2, kernel_size=ksz2, strides=strides2,
        padding=padding2, use_bias=False))
    ref2 = reference(params2, None, x2, kernel_size=ksz2, strides=strides2,
                     padding=padding2, use_bias=False)
    L_out2 = (L2 + 2 * padding2 - 2 * f_half2) // strides2 + 1
    assert out2.shape == (B2, ksz2, L_out2), out2.shape
    err2 = float(jnp.max(jnp.abs(out2 - ref2)))
    assert err2 < 1e-4, f"config-2 mismatch vs reference, max abs err = {err2}"

    # ---- Config 3: longer input -> multiple L tiles (halo stitching across tiles)
    filters3, ksz3, strides3, padding3 = 6, 8, 1, 0
    f_half3 = filters3 // 2
    B3, L3 = 10, 2200
    mu3 = jax.random.uniform(k5, (f_half3,), minval=0.0, maxval=math.pi)
    sig3 = jax.random.uniform(k6, (f_half3,), minval=1.0, maxval=6.0)
    params3 = jnp.stack([mu3, sig3], axis=1).astype(jnp.float32)   # (3, 2)
    x3 = jax.random.normal(k7, (B3, 1, L3), dtype=jnp.float32)

    out3 = jax.block_until_ready(gabor_conv1d(
        params3, None, x3, kernel_size=ksz3, strides=strides3,
        padding=padding3, use_bias=False))
    ref3 = reference(params3, None, x3, kernel_size=ksz3, strides=strides3,
                     padding=padding3, use_bias=False)
    L_out3 = (L3 - 2 * f_half3) // strides3 + 1
    assert out3.shape == (B3, ksz3, L_out3), out3.shape
    err3 = float(jnp.max(jnp.abs(out3 - ref3)))
    assert err3 < 1e-4, f"config-3 mismatch vs reference, max abs err = {err3}"

    print("KERNEL_OK")
</pallas_src>

<mosaic_0001>
module attributes {stable_mosaic.version = 11 : i64} {
  func.func @_gabor_conv1d_kernel(%arg0: i32, %arg1: i32, %arg2: memref<8x128xf32, #tpu.memory_space<vmem>>, %arg3: memref<8x128xf32, #tpu.memory_space<vmem>>, %arg4: memref<16x16xf32, #tpu.memory_space<vmem>>, %arg5: memref<1x128xf32, #tpu.memory_space<vmem>>, %arg6: memref<8x16x128xf32, #tpu.memory_space<vmem>>, %arg7: memref<16x128xf32, #tpu.memory_space<vmem>>) attributes {dimension_semantics = [#tpu.dimension_semantics<parallel>, #tpu.dimension_semantics<parallel>], iteration_bounds = array<i64: 1, 1>, scalar_prefetch = 0 : i64, scratch_operands = 1 : i64, tpu.core_type = #tpu.core_type<tc>, window_params = [{transform_indices = @transform_0, window_bounds = array<i64: 8, 128>}, {transform_indices = @transform_1, window_bounds = array<i64: 8, 128>}, {pipeline_mode = #tpu.pipeline_mode<synchronous>, transform_indices = @transform_2, window_bounds = array<i64: 16, 16>}, {transform_indices = @transform_3, window_bounds = array<i64: 1, 128>}, {transform_indices = @transform_4, window_bounds = array<i64: 8, 16, 128>}]} {
    %c0 = arith.constant 0 : index
    %c0_0 = arith.constant 0 : index
    %0 = vector.load %arg2[%c0, %c0_0] : memref<8x128xf32, #tpu.memory_space<vmem>>, vector<8x128xf32>
    %c0_1 = arith.constant 0 : index
    %c0_2 = arith.constant 0 : index
    %1 = vector.load %arg3[%c0_1, %c0_2] : memref<8x128xf32, #tpu.memory_space<vmem>>, vector<8x128xf32>
    %2 = tpu.concatenate %0, %1 in 1 : vector<8x128xf32>, vector<8x128xf32> -> vector<8x256xf32>
    %c0_3 = arith.constant 0 : index
    %c0_4 = arith.constant 0 : index
    %3 = vector.load %arg4[%c0_3, %c0_4] : memref<16x16xf32, #tpu.memory_space<vmem>>, vector<16x16xf32>
    %c0_5 = arith.constant 0 : index
    %c0_6 = arith.constant 0 : index
    %4 = vector.load %arg5[%c0_5, %c0_6] : memref<1x128xf32, #tpu.memory_space<vmem>>, vector<1x128xf32>
    %c8 = arith.constant 8 : index
    %c0_7 = arith.constant 0 : index
    %5 = vector.load %arg7[%c8, %c0_7] : memref<16x128xf32, #tpu.memory_space<vmem>>, vector<1x128xf32>
    tpu.vector_store %arg7[%c8, %c0_7], %4 {strides = array<i32>} : memref<16x128xf32, #tpu.memory_space<vmem>>, vector<1x128xf32>,
    %cst = arith.constant 0.000000e+00 : f32
    %6 = vector.broadcast %cst : f32 to vector<7x128xf32>
    %c9 = arith.constant 9 : index
    %c0_8 = arith.constant 0 : index
    %7 = vector.load %arg7[%c9, %c0_8] : memref<16x128xf32, #tpu.memory_space<vmem>>, vector<7x128xf32>
    tpu.vector_store %arg7[%c9, %c0_8], %6 {strides = array<i32>} : memref<16x128xf32, #tpu.memory_space<vmem>>, vector<7x128xf32>,
    %8 = vector.extract_strided_slice %2 {offsets = [0, 0], sizes = [1, 128], strides = [1, 1]} : vector<8x256xf32> to vector<1x128xf32>
    %c0_9 = arith.constant 0 : index
    %c0_10 = arith.constant 0 : index
    %9 = vector.load %arg7[%c0_9, %c0_10] : memref<16x128xf32, #tpu.memory_space<vmem>>, vector<1x128xf32>
    tpu.vector_store %arg7[%c0_9, %c0_10], %8 {strides = array<i32>} : memref<16x128xf32, #tpu.memory_space<vmem>>, vector<1x128xf32>,
    %10 = vector.extract_strided_slice %2 {offsets = [0, 1], sizes = [1, 128], strides = [1, 1]} : vector<8x256xf32> to vector<1x128xf32>
    %c1 = arith.constant 1 : index
    %c0_11 = arith.constant 0 : index
    %11 = vector.load %arg7[%c1, %c0_11] : memref<16x128xf32, #tpu.memory_space<vmem>>, vector<1x128xf32>
    tpu.vector_store %arg7[%c1, %c0_11], %10 {strides = array<i32>} : memref<16x128xf32, #tpu.memory_space<vmem>>, vector<1x128xf32>,
    %12 = vector.extract_strided_slice %2 {offsets = [0, 2], sizes = [1, 128], strides = [1, 1]} : vector<8x256xf32> to vector<1x128xf32>
    %c2 = arith.constant 2 : index
    %c0_12 = arith.constant 0 : index
    %13 = vector.load %arg7[%c2, %c0_12] : memref<16x128xf32, #tpu.memory_space<vmem>>, vector<1x128xf32>
    tpu.vector_store %arg7[%c2, %c0_12], %12 {strides = array<i32>} : memref<16x128xf32, #tpu.memory_space<vmem>>, vector<1x128xf32>,
    %14 = vector.extract_strided_slice %2 {offsets = [0, 3], sizes = [1, 128], strides = [1, 1]} : vector<8x256xf32> to vector<1x128xf32>
    %c3 = arith.constant 3 : index
    %c0_13 = arith.constant 0 : index
    %15 = vector.load %arg7[%c3, %c0_13] : memref<16x128xf32, #tpu.memory_space<vmem>>, vector<1x128xf32>
    tpu.vector_store %arg7[%c3, %c0_13], %14 {strides = array<i32>} : memref<16x128xf32, #tpu.memory_space<vmem>>, vector<1x128xf32>,
    %16 = vector.extract_strided_slice %2 {offsets = [0, 4], sizes = [1, 128], strides = [1, 1]} : vector<8x256xf32> to vector<1x128xf32>
    %c4 = arith.constant 4 : index
    %c0_14 = arith.constant 0 : index
    %17 = vector.load %arg7[%c4, %c0_14] : memref<16x128xf32, #tpu.memory_space<vmem>>, vector<1x128xf32>
    tpu.vector_store %arg7[%c4, %c0_14], %16 {strides = array<i32>} : memref<16x128xf32, #tpu.memory_space<vmem>>, vector<1x128xf32>,
    %18 = vector.extract_strided_slice %2 {offsets = [0, 5], sizes = [1, 128], strides = [1, 1]} : vector<8x256xf32> to vector<1x128xf32>
    %c5 = arith.constant 5 : index
    %c0_15 = arith.constant 0 : index
    %19 = vector.load %arg7[%c5, %c0_15] : memref<16x128xf32, #tpu.memory_space<vmem>>, vector<1x128xf32>
    tpu.vector_store %arg7[%c5, %c0_15], %18 {strides = array<i32>} : memref<16x128xf32, #tpu.memory_space<vmem>>, vector<1x128xf32>,
    %20 = vector.extract_strided_slice %2 {offsets = [0, 6], sizes = [1, 128], strides = [1, 1]} : vector<8x256xf32> to vector<1x128xf32>
    %c6 = arith.constant 6 : index
    %c0_16 = arith.constant 0 : index
    %21 = vector.load %arg7[%c6, %c0_16] : memref<16x128xf32, #tpu.memory_space<vmem>>, vector<1x128xf32>
    tpu.vector_store %arg7[%c6, %c0_16], %20 {strides = array<i32>} : memref<16x128xf32, #tpu.memory_space<vmem>>, vector<1x128xf32>,
    %22 = vector.extract_strided_slice %2 {offsets = [0, 7], sizes = [1, 128], strides = [1, 1]} : vector<8x256xf32> to vector<1x128xf32>
    %c7 = arith.constant 7 : index
    %c0_17 = arith.constant 0 : index
    %23 = vector.load %arg7[%c7, %c0_17] : memref<16x128xf32, #tpu.memory_space<vmem>>, vector<1x128xf32>
    tpu.vector_store %arg7[%c7, %c0_17], %22 {strides = array<i32>} : memref<16x128xf32, #tpu.memory_space<vmem>>, vector<1x128xf32>,
    %c0_18 = arith.constant 0 : index
    %c0_19 = arith.constant 0 : index
    %24 = vector.load %arg7[%c0_18, %c0_19] : memref<16x128xf32, #tpu.memory_space<vmem>>, vector<16x128xf32>
    %cst_20 = arith.constant dense<0.000000e+00> : vector<16x128xf32>
    %25 = tpu.matmul %3, %24, %cst_20 {dimension_numbers = #tpu.dot_dimension_numbers<[1], [0], [0], [1], [0, 0, 1, 1], [], []>} : vector<16x16xf32>, vector<16x128xf32>, vector<16x128xf32> -> vector<16x128xf32>
    %c0_21 = arith.constant 0 : index
    %c0_22 = arith.constant 0 : index
    %c0_23 = arith.constant 0 : index
    %26 = vector.load %arg6[%c0_21, %c0_22, %c0_23] : memref<8x16x128xf32, #tpu.memory_space<vmem>>, vector<1x16x128xf32>
    %27 = vector.shape_cast %26 : vector<1x16x128xf32> to vector<16x128xf32>
    %28 = vector.shape_cast %25 : vector<16x128xf32> to vector<1x16x128xf32>
    tpu.vector_store %arg6[%c0_21, %c0_22, %c0_23], %28 {strides = array<i32>} : memref<8x16x128xf32, #tpu.memory_space<vmem>>, vector<1x16x128xf32>,
    %29 = vector.extract_strided_slice %2 {offsets = [1, 0], sizes = [1, 128], strides = [1, 1]} : vector<8x256xf32> to vector<1x128xf32>
    %c0_24 = arith.constant 0 : index
    %c0_25 = arith.constant 0 : index
    %30 = vector.load %arg7[%c0_24, %c0_25] : memref<16x128xf32, #tpu.memory_space<vmem>>, vector<1x128xf32>
    tpu.vector_store %arg7[%c0_24, %c0_25], %29 {strides = array<i32>} : memref<16x128xf32, #tpu.memory_space<vmem>>, vector<1x128xf32>,
    %31 = vector.extract_strided_slice %2 {offsets = [1, 1], sizes = [1, 128], strides = [1, 1]} : vector<8x256xf32> to vector<1x128xf32>
    %c1_26 = arith.constant 1 : index
    %c0_27 = arith.constant 0 : index
    %32 = vector.load %arg7[%c1_26, %c0_27] : memref<16x128xf32, #tpu.memory_space<vmem>>, vector<1x128xf32>
    tpu.vector_store %arg7[%c1_26, %c0_27], %31 {strides = array<i32>} : memref<16x128xf32, #tpu.memory_space<vmem>>, vector<1x128xf32>,
    %33 = vector.extract_strided_slice %2 {offsets = [1, 2], sizes = [1, 128], strides = [1, 1]} : vector<8x256xf32> to vector<1x128xf32>
    %c2_28 = arith.constant 2 : index
    %c0_29 = arith.constant 0 : index
    %34 = vector.load %arg7[%c2_28, %c0_29] : memref<16x128xf32, #tpu.memory_space<vmem>>, vector<1x128xf32>
    tpu.vector_store %arg7[%c2_28, %c0_29], %33 {strides = array<i32>} : memref<16x128xf32, #tpu.memory_space<vmem>>, vector<1x128xf32>,
    %35 = vector.extract_strided_slice %2 {offsets = [1, 3], sizes = [1, 128], strides = [1, 1]} : vector<8x256xf32> to vector<1x128xf32>
    %c3_30 = arith.constant 3 : index
    %c0_31 = arith.constant 0 : index
    %36 = vector.load %arg7[%c3_30, %c0_31] : memref<16x128xf32, #tpu.memory_space<vmem>>, vector<1x128xf32>
    tpu.vector_store %arg7[%c3_30, %c0_31], %35 {strides = array<i32>} : memref<16x128xf32, #tpu.memory_space<vmem>>, vector<1x128xf32>,
    %37 = vector.extract_strided_slice %2 {offsets = [1, 4], sizes = [1, 128], strides = [1, 1]} : vector<8x256xf32> to vector<1x128xf32>
    %c4_32 = arith.constant 4 : index
    %c0_33 = arith.constant 0 : index
    %38 = vector.load %arg7[%c4_32, %c0_33] : memref<16x128xf32, #tpu.memory_space<vmem>>, vector<1x128xf32>
    tpu.vector_store %arg7[%c4_32, %c0_33], %37 {strides = array<i32>} : memref<16x128xf32, #tpu.memory_space<vmem>>, vector<1x128xf32>,
    %39 = vector.extract_strided_slice %2 {offsets = [1, 5], sizes = [1, 128], strides = [1, 1]} : vector<8x256xf32> to vector<1x128xf32>
    %c5_34 = arith.constant 5 : index
    %c0_35 = arith.constant 0 : index
    %40 = vector.load %arg7[%c5_34, %c0_35] : memref<16x128xf32, #tpu.memory_space<vmem>>, vector<1x128xf32>
    tpu.vector_store %arg7[%c5_34, %c0_35], %39 {strides = array<i32>} : memref<16x128xf32, #tpu.memory_space<vmem>>, vector<1x128xf32>,
    %41 = vector.extract_strided_slice %2 {offsets = [1, 6], sizes = [1, 128], strides = [1, 1]} : vector<8x256xf32> to vector<1x128xf32>
    %c6_36 = arith.constant 6 : index
    %c0_37 = arith.constant 0 : index
    %42 = vector.load %arg7[%c6_36, %c0_37] : memref<16x128xf32, #tpu.memory_space<vmem>>, vector<1x128xf32>
    tpu.vector_store %arg7[%c6_36, %c0_37], %41 {strides = array<i32>} : memref<16x128xf32, #tpu.memory_space<vmem>>, vector<1x128xf32>,
    %43 = vector.extract_strided_slice %2 {offsets = [1, 7], sizes = [1, 128], strides = [1, 1]} : vector<8x256xf32> to vector<1x128xf32>
    %c7_38 = arith.constant 7 : index
    %c0_39 = arith.constant 0 : index
    %44 = vector.load %arg7[%c7_38, %c0_39] : memref<16x128xf32, #tpu.memory_space<vmem>>, vector<1x128xf32>
    tpu.vector_store %arg7[%c7_38, %c0_39], %43 {strides = array<i32>} : memref<16x128xf32, #tpu.memory_space<vmem>>, vector<1x128xf32>,
    %c0_40 = arith.constant 0 : index
    %c0_41 = arith.constant 0 : index
    %45 = vector.load %arg7[%c0_40, %c0_41] : memref<16x128xf32, #tpu.memory_space<vmem>>, vector<16x128xf32>
    %cst_42 = arith.constant dense<0.000000e+00> : vector<16x128xf32>
    %46 = tpu.matmul %3, %45, %cst_42 {dimension_numbers = #tpu.dot_dimension_numbers<[1], [0], [0], [1], [0, 0, 1, 1], [], []>} : vector<16x16xf32>, vector<16x128xf32>, vector<16x128xf32> -> vector<16x128xf32>
    %c1_43 = arith.constant 1 : index
    %c0_44 = arith.constant 0 : index
    %c0_45 = arith.constant 0 : index
    %47 = vector.load %arg6[%c1_43, %c0_44, %c0_45] : memref<8x16x128xf32, #tpu.memory_space<vmem>>, vector<1x16x128xf32>
    %48 = vector.shape_cast %47 : vector<1x16x128xf32> to vector<16x128xf32>
    %49 = vector.shape_cast %46 : vector<16x128xf32> to vector<1x16x128xf32>
    tpu.vector_store %arg6[%c1_43, %c0_44, %c0_45], %49 {strides = array<i32>} : memref<8x16x128xf32, #tpu.memory_space<vmem>>, vector<1x16x128xf32>,
    %50 = vector.extract_strided_slice %2 {offsets = [2, 0], sizes = [1, 128], strides = [1, 1]} : vector<8x256xf32> to vector<1x128xf32>
    %c0_46 = arith.constant 0 : index
    %c0_47 = arith.constant 0 : index
    %51 = vector.load %arg7[%c0_46, %c0_47] : memref<16x128xf32, #tpu.memory_space<vmem>>, vector<1x128xf32>
    tpu.vector_store %arg7[%c0_46, %c0_47], %50 {strides = array<i32>} : memref<16x128xf32, #tpu.memory_space<vmem>>, vector<1x128xf32>,
    %52 = vector.extract_strided_slice %2 {offsets = [2, 1], sizes = [1, 128], strides = [1, 1]} : vector<8x256xf32> to vector<1x128xf32>
    %c1_48 = arith.constant 1 : index
    %c0_49 = arith.constant 0 : index
    %53 = vector.load %arg7[%c1_48, %c0_49] : memref<16x128xf32, #tpu.memory_space<vmem>>, vector<1x128xf32>
    tpu.vector_store %arg7[%c1_48, %c0_49], %52 {strides = array<i32>} : memref<16x128xf32, #tpu.memory_space<vmem>>, vector<1x128xf32>,
    %54 = vector.extract_strided_slice %2 {offsets = [2, 2], sizes = [1, 128], strides = [1, 1]} : vector<8x256xf32> to vector<1x128xf32>
    %c2_50 = arith.constant 2 : index
    %c0_51 = arith.constant 0 : index
    %55 = vector.load %arg7[%c2_50, %c0_51] : memref<16x128xf32, #tpu.memory_space<vmem>>, vector<1x128xf32>
    tpu.vector_store %arg7[%c2_50, %c0_51], %54 {strides = array<i32>} : memref<16x128xf32, #tpu.memory_space<vmem>>, vector<1x128xf32>,
    %56 = vector.extract_strided_slice %2 {offsets = [2, 3], sizes = [1, 128], strides = [1, 1]} : vector<8x256xf32> to vector<1x128xf32>
    %c3_52 = arith.constant 3 : index
    %c0_53 = arith.constant 0 : index
    %57 = vector.load %arg7[%c3_52, %c0_53] : memref<16x128xf32, #tpu.memory_space<vmem>>, vector<1x128xf32>
    tpu.vector_store %arg7[%c3_52, %c0_53], %56 {strides = array<i32>} : memref<16x128xf32, #tpu.memory_space<vmem>>, vector<1x128xf32>,
    %58 = vector.extract_strided_slice %2 {offsets = [2, 4], sizes = [1, 128], strides = [1, 1]} : vector<8x256xf32> to vector<1x128xf32>
    %c4_54 = arith.constant 4 : index
    %c0_55 = arith.constant 0 : index
    %59 = vector.load %arg7[%c4_54, %c0_55] : memref<16x128xf32, #tpu.memory_space<vmem>>, vector<1x128xf32>
    tpu.vector_store %arg7[%c4_54, %c0_55], %58 {strides = array<i32>} : memref<16x128xf32, #tpu.memory_space<vmem>>, vector<1x128xf32>,
    %60 = vector.extract_strided_slice %2 {offsets = [2, 5], sizes = [1, 128], strides = [1, 1]} : vector<8x256xf32> to vector<1x128xf32>
    %c5_56 = arith.constant 5 : index
    %c0_57 = arith.constant 0 : index
    %61 = vector.load %arg7[%c5_56, %c0_57] : memref<16x128xf32, #tpu.memory_space<vmem>>, vector<1x128xf32>
    tpu.vector_store %arg7[%c5_56, %c0_57], %60 {strides = array<i32>} : memref<16x128xf32, #tpu.memory_space<vmem>>, vector<1x128xf32>,
    %62 = vector.extract_strided_slice %2 {offsets = [2, 6], sizes = [1, 128], strides = [1, 1]} : vector<8x256xf32> to vector<1x128xf32>
    %c6_58 = arith.constant 6 : index
    %c0_59 = arith.constant 0 : index
    %63 = vector.load %arg7[%c6_58, %c0_59] : memref<16x128xf32, #tpu.memory_space<vmem>>, vector<1x128xf32>
    tpu.vector_store %arg7[%c6_58, %c0_59], %62 {strides = array<i32>} : memref<16x128xf32, #tpu.memory_space<vmem>>, vector<1x128xf32>,
    %64 = vector.extract_strided_slice %2 {offsets = [2, 7], sizes = [1, 128], strides = [1, 1]} : vector<8x256xf32> to vector<1x128xf32>
    %c7_60 = arith.constant 7 : index
    %c0_61 = arith.constant 0 : index
    %65 = vector.load %arg7[%c7_60, %c0_61] : memref<16x128xf32, #tpu.memory_space<vmem>>, vector<1x128xf32>
    tpu.vector_store %arg7[%c7_60, %c0_61], %64 {strides = array<i32>} : memref<16x128xf32, #tpu.memory_space<vmem>>, vector<1x128xf32>,
    %c0_62 = arith.constant 0 : index
    %c0_63 = arith.constant 0 : index
    %66 = vector.load %arg7[%c0_62, %c0_63] : memref<16x128xf32, #tpu.memory_space<vmem>>, vector<16x128xf32>
    %cst_64 = arith.constant dense<0.000000e+00> : vector<16x128xf32>
    %67 = tpu.matmul %3, %66, %cst_64 {dimension_numbers = #tpu.dot_dimension_numbers<[1], [0], [0], [1], [0, 0, 1, 1], [], []>} : vector<16x16xf32>, vector<16x128xf32>, vector<16x128xf32> -> vector<16x128xf32>
    %c2_65 = arith.constant 2 : index
    %c0_66 = arith.constant 0 : index
    %c0_67 = arith.constant 0 : index
    %68 = vector.load %arg6[%c2_65, %c0_66, %c0_67] : memref<8x16x128xf32, #tpu.memory_space<vmem>>, vector<1x16x128xf32>
    %69 = vector.shape_cast %68 : vector<1x16x128xf32> to vector<16x128xf32>
    %70 = vector.shape_cast %67 : vector<16x128xf32> to vector<1x16x128xf32>
    tpu.vector_store %arg6[%c2_65, %c0_66, %c0_67], %70 {strides = array<i32>} : memref<8x16x128xf32, #tpu.memory_space<vmem>>, vector<1x16x128xf32>,
    %71 = vector.extract_strided_slice %2 {offsets = [3, 0], sizes = [1, 128], strides = [1, 1]} : vector<8x256xf32> to vector<1x128xf32>
    %c0_68 = arith.constant 0 : index
    %c0_69 = arith.constant 0 : index
    %72 = vector.load %arg7[%c0_68, %c0_69] : memref<16x128xf32, #tpu.memory_space<vmem>>, vector<1x128xf32>
    tpu.vector_store %arg7[%c0_68, %c0_69], %71 {strides = array<i32>} : memref<16x128xf32, #tpu.memory_space<vmem>>, vector<1x128xf32>,
    %73 = vector.extract_strided_slice %2 {offsets = [3, 1], sizes = [1, 128], strides = [1, 1]} : vector<8x256xf32> to vector<1x128xf32>
    %c1_70 = arith.constant 1 : index
    %c0_71 = arith.constant 0 : index
    %74 = vector.load %arg7[%c1_70, %c0_71] : memref<16x128xf32, #tpu.memory_space<vmem>>, vector<1x128xf32>
    tpu.vector_store %arg7[%c1_70, %c0_71], %73 {strides = array<i32>} : memref<16x128xf32, #tpu.memory_space<vmem>>, vector<1x128xf32>,
    %75 = vector.extract_strided_slice %2 {offsets = [3, 2], sizes = [1, 128], strides = [1, 1]} : vector<8x256xf32> to vector<1x128xf32>
    %c2_72 = arith.constant 2 : index
    %c0_73 = arith.constant 0 : index
    %76 = vector.load %arg7[%c2_72, %c0_73] : memref<16x128xf32, #tpu.memory_space<vmem>>, vector<1x128xf32>
    tpu.vector_store %arg7[%c2_72, %c0_73], %75 {strides = array<i32>} : memref<16x128xf32, #tpu.memory_space<vmem>>, vector<1x128xf32>,
    %77 = vector.extract_strided_slice %2 {offsets = [3, 3], sizes = [1, 128], strides = [1, 1]} : vector<8x256xf32> to vector<1x128xf32>
    %c3_74 = arith.constant 3 : index
    %c0_75 = arith.constant 0 : index
    %78 = vector.load %arg7[%c3_74, %c0_75] : memref<16x128xf32, #tpu.memory_space<vmem>>, vector<1x128xf32>
    tpu.vector_store %arg7[%c3_74, %c0_75], %77 {strides = array<i32>} : memref<16x128xf32, #tpu.memory_space<vmem>>, vector<1x128xf32>,
    %79 = vector.extract_strided_slice %2 {offsets = [3, 4], sizes = [1, 128], strides = [1, 1]} : vector<8x256xf32> to vector<1x128xf32>
    %c4_76 = arith.constant 4 : index
    %c0_77 = arith.constant 0 : index
    %80 = vector.load %arg7[%c4_76, %c0_77] : memref<16x128xf32, #tpu.memory_space<vmem>>, vector<1x128xf32>
    tpu.vector_store %arg7[%c4_76, %c0_77], %79 {strides = array<i32>} : memref<16x128xf32, #tpu.memory_space<vmem>>, vector<1x128xf32>,
    %81 = vector.extract_strided_slice %2 {offsets = [3, 5], sizes = [1, 128], strides = [1, 1]} : vector<8x256xf32> to vector<1x128xf32>
    %c5_78 = arith.constant 5 : index
    %c0_79 = arith.constant 0 : index
    %82 = vector.load %arg7[%c5_78, %c0_79] : memref<16x128xf32, #tpu.memory_space<vmem>>, vector<1x128xf32>
    tpu.vector_store %arg7[%c5_78, %c0_79], %81 {strides = array<i32>} : memref<16x128xf32, #tpu.memory_space<vmem>>, vector<1x128xf32>,
    %83 = vector.extract_strided_slice %2 {offsets = [3, 6], sizes = [1, 128], strides = [1, 1]} : vector<8x256xf32> to vector<1x128xf32>
    %c6_80 = arith.constant 6 : index
    %c0_81 = arith.constant 0 : index
    %84 = vector.load %arg7[%c6_80, %c0_81] : memref<16x128xf32, #tpu.memory_space<vmem>>, vector<1x128xf32>
    tpu.vector_store %arg7[%c6_80, %c0_81], %83 {strides = array<i32>} : memref<16x128xf32, #tpu.memory_space<vmem>>, vector<1x128xf32>,
    %85 = vector.extract_strided_slice %2 {offsets = [3, 7], sizes = [1, 128], strides = [1, 1]} : vector<8x256xf32> to vector<1x128xf32>
    %c7_82 = arith.constant 7 : index
    %c0_83 = arith.constant 0 : index
    %86 = vector.load %arg7[%c7_82, %c0_83] : memref<16x128xf32, #tpu.memory_space<vmem>>, vector<1x128xf32>
    tpu.vector_store %arg7[%c7_82, %c0_83], %85 {strides = array<i32>} : memref<16x128xf32, #tpu.memory_space<vmem>>, vector<1x128xf32>,
    %c0_84 = arith.constant 0 : index
    %c0_85 = arith.constant 0 : index
    %87 = vector.load %arg7[%c0_84, %c0_85] : memref<16x128xf32, #tpu.memory_space<vmem>>, vector<16x128xf32>
    %cst_86 = arith.constant dense<0.000000e+00> : vector<16x128xf32>
    %88 = tpu.matmul %3, %87, %cst_86 {dimension_numbers = #tpu.dot_dimension_numbers<[1], [0], [0], [1], [0, 0, 1, 1], [], []>} : vector<16x16xf32>, vector<16x128xf32>, vector<16x128xf32> -> vector<16x128xf32>
    %c3_87 = arith.constant 3 : index
    %c0_88 = arith.constant 0 : index
    %c0_89 = arith.constant 0 : index
    %89 = vector.load %arg6[%c3_87, %c0_88, %c0_89] : memref<8x16x128xf32, #tpu.memory_space<vmem>>, vector<1x16x128xf32>
    %90 = vector.shape_cast %89 : vector<1x16x128xf32> to vector<16x128xf32>
    %91 = vector.shape_cast %88 : vector<16x128xf32> to vector<1x16x128xf32>
    tpu.vector_store %arg6[%c3_87, %c0_88, %c0_89], %91 {strides = array<i32>} : memref<8x16x128xf32, #tpu.memory_space<vmem>>, vector<1x16x128xf32>,
    %92 = vector.extract_strided_slice %2 {offsets = [4, 0], sizes = [1, 128], strides = [1, 1]} : vector<8x256xf32> to vector<1x128xf32>
    %c0_90 = arith.constant 0 : index
    %c0_91 = arith.constant 0 : index
    %93 = vector.load %arg7[%c0_90, %c0_91] : memref<16x128xf32, #tpu.memory_space<vmem>>, vector<1x128xf32>
    tpu.vector_store %arg7[%c0_90, %c0_91], %92 {strides = array<i32>} : memref<16x128xf32, #tpu.memory_space<vmem>>, vector<1x128xf32>,
    %94 = vector.extract_strided_slice %2 {offsets = [4, 1], sizes = [1, 128], strides = [1, 1]} : vector<8x256xf32> to vector<1x128xf32>
    %c1_92 = arith.constant 1 : index
    %c0_93 = arith.constant 0 : index
    %95 = vector.load %arg7[%c1_92, %c0_93] : memref<16x128xf32, #tpu.memory_space<vmem>>, vector<1x128xf32>
    tpu.vector_store %arg7[%c1_92, %c0_93], %94 {strides = array<i32>} : memref<16x128xf32, #tpu.memory_space<vmem>>, vector<1x128xf32>,
    %96 = vector.extract_strided_slice %2 {offsets = [4, 2], sizes = [1, 128], strides = [1, 1]} : vector<8x256xf32> to vector<1x128xf32>
    %c2_94 = arith.constant 2 : index
    %c0_95 = arith.constant 0 : index
    %97 = vector.load %arg7[%c2_94, %c0_95] : memref<16x128xf32, #tpu.memory_space<vmem>>, vector<1x128xf32>
    tpu.vector_store %arg7[%c2_94, %c0_95], %96 {strides = array<i32>} : memref<16x128xf32, #tpu.memory_space<vmem>>, vector<1x128xf32>,
    %98 = vector.extract_strided_slice %2 {offsets = [4, 3], sizes = [1, 128], strides = [1, 1]} : vector<8x256xf32> to vector<1x128xf32>
    %c3_96 = arith.constant 3 : index
    %c0_97 = arith.constant 0 : index
    %99 = vector.load %arg7[%c3_96, %c0_97] : memref<16x128xf32, #tpu.memory_space<vmem>>, vector<1x128xf32>
    tpu.vector_store %arg7[%c3_96, %c0_97], %98 {strides = array<i32>} : memref<16x128xf32, #tpu.memory_space<vmem>>, vector<1x128xf32>,
    %100 = vector.extract_strided_slice %2 {offsets = [4, 4], sizes = [1, 128], strides = [1, 1]} : vector<8x256xf32> to vector<1x128xf32>
    %c4_98 = arith.constant 4 : index
    %c0_99 = arith.constant 0 : index
    %101 = vector.load %arg7[%c4_98, %c0_99] : memref<16x128xf32, #tpu.memory_space<vmem>>, vector<1x128xf32>
    tpu.vector_store %arg7[%c4_98, %c0_99], %100 {strides = array<i32>} : memref<16x128xf32, #tpu.memory_space<vmem>>, vector<1x128xf32>,
    %102 = vector.extract_strided_slice %2 {offsets = [4, 5], sizes = [1, 128], strides = [1, 1]} : vector<8x256xf32> to vector<1x128xf32>
    %c5_100 = arith.constant 5 : index
    %c0_101 = arith.constant 0 : index
    %103 = vector.load %arg7[%c5_100, %c0_101] : memref<16x128xf32, #tpu.memory_space<vmem>>, vector<1x128xf32>
    tpu.vector_store %arg7[%c5_100, %c0_101], %102 {strides = array<i32>} : memref<16x128xf32, #tpu.memory_space<vmem>>, vector<1x128xf32>,
    %104 = vector.extract_strided_slice %2 {offsets = [4, 6], sizes = [1, 128], strides = [1, 1]} : vector<8x256xf32> to vector<1x128xf32>
    %c6_102 = arith.constant 6 : index
    %c0_103 = arith.constant 0 : index
    %105 = vector.load %arg7[%c6_102, %c0_103] : memref<16x128xf32, #tpu.memory_space<vmem>>, vector<1x128xf32>
    tpu.vector_store %arg7[%c6_102, %c0_103], %104 {strides = array<i32>} : memref<16x128xf32, #tpu.memory_space<vmem>>, vector<1x128xf32>,
    %106 = vector.extract_strided_slice %2 {offsets = [4, 7], sizes = [1, 128], strides = [1, 1]} : vector<8x256xf32> to vector<1x128xf32>
    %c7_104 = arith.constant 7 : index
    %c0_105 = arith.constant 0 : index
    %107 = vector.load %arg7[%c7_104, %c0_105] : memref<16x128xf32, #tpu.memory_space<vmem>>, vector<1x128xf32>
    tpu.vector_store %arg7[%c7_104, %c0_105], %106 {strides = array<i32>} : memref<16x128xf32, #tpu.memory_space<vmem>>, vector<1x128xf32>,
    %c0_106 = arith.constant 0 : index
    %c0_107 = arith.constant 0 : index
    %108 = vector.load %arg7[%c0_106, %c0_107] : memref<16x128xf32, #tpu.memory_space<vmem>>, vector<16x128xf32>
    %cst_108 = arith.constant dense<0.000000e+00> : vector<16x128xf32>
    %109 = tpu.matmul %3, %108, %cst_108 {dimension_numbers = #tpu.dot_dimension_numbers<[1], [0], [0], [1], [0, 0, 1, 1], [], []>} : vector<16x16xf32>, vector<16x128xf32>, vector<16x128xf32> -> vector<16x128xf32>
    %c4_109 = arith.constant 4 : index
    %c0_110 = arith.constant 0 : index
    %c0_111 = arith.constant 0 : index
    %110 = vector.load %arg6[%c4_109, %c0_110, %c0_111] : memref<8x16x128xf32, #tpu.memory_space<vmem>>, vector<1x16x128xf32>
    %111 = vector.shape_cast %110 : vector<1x16x128xf32> to vector<16x128xf32>
    %112 = vector.shape_cast %109 : vector<16x128xf32> to vector<1x16x128xf32>
    tpu.vector_store %arg6[%c4_109, %c0_110, %c0_111], %112 {strides = array<i32>} : memref<8x16x128xf32, #tpu.memory_space<vmem>>, vector<1x16x128xf32>,
    %113 = vector.extract_strided_slice %2 {offsets = [5, 0], sizes = [1, 128], strides = [1, 1]} : vector<8x256xf32> to vector<1x128xf32>
    %c0_112 = arith.constant 0 : index
    %c0_113 = arith.constant 0 : index
    %114 = vector.load %arg7[%c0_112, %c0_113] : memref<16x128xf32, #tpu.memory_space<vmem>>, vector<1x128xf32>
    tpu.vector_store %arg7[%c0_112, %c0_113], %113 {strides = array<i32>} : memref<16x128xf32, #tpu.memory_space<vmem>>, vector<1x128xf32>,
    %115 = vector.extract_strided_slice %2 {offsets = [5, 1], sizes = [1, 128], strides = [1, 1]} : vector<8x256xf32> to vector<1x128xf32>
    %c1_114 = arith.constant 1 : index
    %c0_115 = arith.constant 0 : index
    %116 = vector.load %arg7[%c1_114, %c0_115] : memref<16x128xf32, #tpu.memory_space<vmem>>, vector<1x128xf32>
    tpu.vector_store %arg7[%c1_114, %c0_115], %115 {strides = array<i32>} : memref<16x128xf32, #tpu.memory_space<vmem>>, vector<1x128xf32>,
    %117 = vector.extract_strided_slice %2 {offsets = [5, 2], sizes = [1, 128], strides = [1, 1]} : vector<8x256xf32> to vector<1x128xf32>
    %c2_116 = arith.constant 2 : index
    %c0_117 = arith.constant 0 : index
    %118 = vector.load %arg7[%c2_116, %c0_117] : memref<16x128xf32, #tpu.memory_space<vmem>>, vector<1x128xf32>
    tpu.vector_store %arg7[%c2_116, %c0_117], %117 {strides = array<i32>} : memref<16x128xf32, #tpu.memory_space<vmem>>, vector<1x128xf32>,
    %119 = vector.extract_strided_slice %2 {offsets = [5, 3], sizes = [1, 128], strides = [1, 1]} : vector<8x256xf32> to vector<1x128xf32>
    %c3_118 = arith.constant 3 : index
    %c0_119 = arith.constant 0 : index
    %120 = vector.load %arg7[%c3_118, %c0_119] : memref<16x128xf32, #tpu.memory_space<vmem>>, vector<1x128xf32>
    tpu.vector_store %arg7[%c3_118, %c0_119], %119 {strides = array<i32>} : memref<16x128xf32, #tpu.memory_space<vmem>>, vector<1x128xf32>,
    %121 = vector.extract_strided_slice %2 {offsets = [5, 4], sizes = [1, 128], strides = [1, 1]} : vector<8x256xf32> to vector<1x128xf32>
    %c4_120 = arith.constant 4 : index
    %c0_121 = arith.constant 0 : index
    %122 = vector.load %arg7[%c4_120, %c0_121] : memref<16x128xf32, #tpu.memory_space<vmem>>, vector<1x128xf32>
    tpu.vector_store %arg7[%c4_120, %c0_121], %121 {strides = array<i32>} : memref<16x128xf32, #tpu.memory_space<vmem>>, vector<1x128xf32>,
    %123 = vector.extract_strided_slice %2 {offsets = [5, 5], sizes = [1, 128], strides = [1, 1]} : vector<8x256xf32> to vector<1x128xf32>
    %c5_122 = arith.constant 5 : index
    %c0_123 = arith.constant 0 : index
    %124 = vector.load %arg7[%c5_122, %c0_123] : memref<16x128xf32, #tpu.memory_space<vmem>>, vector<1x128xf32>
    tpu.vector_store %arg7[%c5_122, %c0_123], %123 {strides = array<i32>} : memref<16x128xf32, #tpu.memory_space<vmem>>, vector<1x128xf32>,
    %125 = vector.extract_strided_slice %2 {offsets = [5, 6], sizes = [1, 128], strides = [1, 1]} : vector<8x256xf32> to vector<1x128xf32>
    %c6_124 = arith.constant 6 : index
    %c0_125 = arith.constant 0 : index
    %126 = vector.load %arg7[%c6_124, %c0_125] : memref<16x128xf32, #tpu.memory_space<vmem>>, vector<1x128xf32>
    tpu.vector_store %arg7[%c6_124, %c0_125], %125 {strides = array<i32>} : memref<16x128xf32, #tpu.memory_space<vmem>>, vector<1x128xf32>,
    %127 = vector.extract_strided_slice %2 {offsets = [5, 7], sizes = [1, 128], strides = [1, 1]} : vector<8x256xf32> to vector<1x128xf32>
    %c7_126 = arith.constant 7 : index
    %c0_127 = arith.constant 0 : index
    %128 = vector.load %arg7[%c7_126, %c0_127] : memref<16x128xf32, #tpu.memory_space<vmem>>, vector<1x128xf32>
    tpu.vector_store %arg7[%c7_126, %c0_127], %127 {strides = array<i32>} : memref<16x128xf32, #tpu.memory_space<vmem>>, vector<1x128xf32>,
    %c0_128 = arith.constant 0 : index
    %c0_129 = arith.constant 0 : index
    %129 = vector.load %arg7[%c0_128, %c0_129] : memref<16x128xf32, #tpu.memory_space<vmem>>, vector<16x128xf32>
    %cst_130 = arith.constant dense<0.000000e+00> : vector<16x128xf32>
    %130 = tpu.matmul %3, %129, %cst_130 {dimension_numbers = #tpu.dot_dimension_numbers<[1], [0], [0], [1], [0, 0, 1, 1], [], []>} : vector<16x16xf32>, vector<16x128xf32>, vector<16x128xf32> -> vector<16x128xf32>
    %c5_131 = arith.constant 5 : index
    %c0_132 = arith.constant 0 : index
    %c0_133 = arith.constant 0 : index
    %131 = vector.load %arg6[%c5_131, %c0_132, %c0_133] : memref<8x16x128xf32, #tpu.memory_space<vmem>>, vector<1x16x128xf32>
    %132 = vector.shape_cast %131 : vector<1x16x128xf32> to vector<16x128xf32>
    %133 = vector.shape_cast %130 : vector<16x128xf32> to vector<1x16x128xf32>
    tpu.vector_store %arg6[%c5_131, %c0_132, %c0_133], %133 {strides = array<i32>} : memref<8x16x128xf32, #tpu.memory_space<vmem>>, vector<1x16x128xf32>,
    %134 = vector.extract_strided_slice %2 {offsets = [6, 0], sizes = [1, 128], strides = [1, 1]} : vector<8x256xf32> to vector<1x128xf32>
    %c0_134 = arith.constant 0 : index
    %c0_135 = arith.constant 0 : index
    %135 = vector.load %arg7[%c0_134, %c0_135] : memref<16x128xf32, #tpu.memory_space<vmem>>, vector<1x128xf32>
    tpu.vector_store %arg7[%c0_134, %c0_135], %134 {strides = array<i32>} : memref<16x128xf32, #tpu.memory_space<vmem>>, vector<1x128xf32>,
    %136 = vector.extract_strided_slice %2 {offsets = [6, 1], sizes = [1, 128], strides = [1, 1]} : vector<8x256xf32> to vector<1x128xf32>
    %c1_136 = arith.constant 1 : index
    %c0_137 = arith.constant 0 : index
    %137 = vector.load %arg7[%c1_136, %c0_137] : memref<16x128xf32, #tpu.memory_space<vmem>>, vector<1x128xf32>
    tpu.vector_store %arg7[%c1_136, %c0_137], %136 {strides = array<i32>} : memref<16x128xf32, #tpu.memory_space<vmem>>, vector<1x128xf32>,
    %138 = vector.extract_strided_slice %2 {offsets = [6, 2], sizes = [1, 128], strides = [1, 1]} : vector<8x256xf32> to vector<1x128xf32>
    %c2_138 = arith.constant 2 : index
    %c0_139 = arith.constant 0 : index
    %139 = vector.load %arg7[%c2_138, %c0_139] : memref<16x128xf32, #tpu.memory_space<vmem>>, vector<1x128xf32>
    tpu.vector_store %arg7[%c2_138, %c0_139], %138 {strides = array<i32>} : memref<16x128xf32, #tpu.memory_space<vmem>>, vector<1x128xf32>,
    %140 = vector.extract_strided_slice %2 {offsets = [6, 3], sizes = [1, 128], strides = [1, 1]} : vector<8x256xf32> to vector<1x128xf32>
    %c3_140 = arith.constant 3 : index
    %c0_141 = arith.constant 0 : index
    %141 = vector.load %arg7[%c3_140, %c0_141] : memref<16x128xf32, #tpu.memory_space<vmem>>, vector<1x128xf32>
    tpu.vector_store %arg7[%c3_140, %c0_141], %140 {strides = array<i32>} : memref<16x128xf32, #tpu.memory_space<vmem>>, vector<1x128xf32>,
    %142 = vector.extract_strided_slice %2 {offsets = [6, 4], sizes = [1, 128], strides = [1, 1]} : vector<8x256xf32> to vector<1x128xf32>
    %c4_142 = arith.constant 4 : index
    %c0_143 = arith.constant 0 : index
    %143 = vector.load %arg7[%c4_142, %c0_143] : memref<16x128xf32, #tpu.memory_space<vmem>>, vector<1x128xf32>
    tpu.vector_store %arg7[%c4_142, %c0_143], %142 {strides = array<i32>} : memref<16x128xf32, #tpu.memory_space<vmem>>, vector<1x128xf32>,
    %144 = vector.extract_strided_slice %2 {offsets = [6, 5], sizes = [1, 128], strides = [1, 1]} : vector<8x256xf32> to vector<1x128xf32>
    %c5_144 = arith.constant 5 : index
    %c0_145 = arith.constant 0 : index
    %145 = vector.load %arg7[%c5_144, %c0_145] : memref<16x128xf32, #tpu.memory_space<vmem>>, vector<1x128xf32>
    tpu.vector_store %arg7[%c5_144, %c0_145], %144 {strides = array<i32>} : memref<16x128xf32, #tpu.memory_space<vmem>>, vector<1x128xf32>,
    %146 = vector.extract_strided_slice %2 {offsets = [6, 6], sizes = [1, 128], strides = [1, 1]} : vector<8x256xf32> to vector<1x128xf32>
    %c6_146 = arith.constant 6 : index
    %c0_147 = arith.constant 0 : index
    %147 = vector.load %arg7[%c6_146, %c0_147] : memref<16x128xf32, #tpu.memory_space<vmem>>, vector<1x128xf32>
    tpu.vector_store %arg7[%c6_146, %c0_147], %146 {strides = array<i32>} : memref<16x128xf32, #tpu.memory_space<vmem>>, vector<1x128xf32>,
    %148 = vector.extract_strided_slice %2 {offsets = [6, 7], sizes = [1, 128], strides = [1, 1]} : vector<8x256xf32> to vector<1x128xf32>
    %c7_148 = arith.constant 7 : index
    %c0_149 = arith.constant 0 : index
    %149 = vector.load %arg7[%c7_148, %c0_149] : memref<16x128xf32, #tpu.memory_space<vmem>>, vector<1x128xf32>
    tpu.vector_store %arg7[%c7_148, %c0_149], %148 {strides = array<i32>} : memref<16x128xf32, #tpu.memory_space<vmem>>, vector<1x128xf32>,
    %c0_150 = arith.constant 0 : index
    %c0_151 = arith.constant 0 : index
    %150 = vector.load %arg7[%c0_150, %c0_151] : memref<16x128xf32, #tpu.memory_space<vmem>>, vector<16x128xf32>
    %cst_152 = arith.constant dense<0.000000e+00> : vector<16x128xf32>
    %151 = tpu.matmul %3, %150, %cst_152 {dimension_numbers = #tpu.dot_dimension_numbers<[1], [0], [0], [1], [0, 0, 1, 1], [], []>} : vector<16x16xf32>, vector<16x128xf32>, vector<16x128xf32> -> vector<16x128xf32>
    %c6_153 = arith.constant 6 : index
    %c0_154 = arith.constant 0 : index
    %c0_155 = arith.constant 0 : index
    %152 = vector.load %arg6[%c6_153, %c0_154, %c0_155] : memref<8x16x128xf32, #tpu.memory_space<vmem>>, vector<1x16x128xf32>
    %153 = vector.shape_cast %152 : vector<1x16x128xf32> to vector<16x128xf32>
    %154 = vector.shape_cast %151 : vector<16x128xf32> to vector<1x16x128xf32>
    tpu.vector_store %arg6[%c6_153, %c0_154, %c0_155], %154 {strides = array<i32>} : memref<8x16x128xf32, #tpu.memory_space<vmem>>, vector<1x16x128xf32>,
    %155 = vector.extract_strided_slice %2 {offsets = [7, 0], sizes = [1, 128], strides = [1, 1]} : vector<8x256xf32> to vector<1x128xf32>
    %c0_156 = arith.constant 0 : index
    %c0_157 = arith.constant 0 : index
    %156 = vector.load %arg7[%c0_156, %c0_157] : memref<16x128xf32, #tpu.memory_space<vmem>>, vector<1x128xf32>
    tpu.vector_store %arg7[%c0_156, %c0_157], %155 {strides = array<i32>} : memref<16x128xf32, #tpu.memory_space<vmem>>, vector<1x128xf32>,
    %157 = vector.extract_strided_slice %2 {offsets = [7, 1], sizes = [1, 128], strides = [1, 1]} : vector<8x256xf32> to vector<1x128xf32>
    %c1_158 = arith.constant 1 : index
    %c0_159 = arith.constant 0 : index
    %158 = vector.load %arg7[%c1_158, %c0_159] : memref<16x128xf32, #tpu.memory_space<vmem>>, vector<1x128xf32>
    tpu.vector_store %arg7[%c1_158, %c0_159], %157 {strides = array<i32>} : memref<16x128xf32, #tpu.memory_space<vmem>>, vector<1x128xf32>,
    %159 = vector.extract_strided_slice %2 {offsets = [7, 2], sizes = [1, 128], strides = [1, 1]} : vector<8x256xf32> to vector<1x128xf32>
    %c2_160 = arith.constant 2 : index
    %c0_161 = arith.constant 0 : index
    %160 = vector.load %arg7[%c2_160, %c0_161] : memref<16x128xf32, #tpu.memory_space<vmem>>, vector<1x128xf32>
    tpu.vector_store %arg7[%c2_160, %c0_161], %159 {strides = array<i32>} : memref<16x128xf32, #tpu.memory_space<vmem>>, vector<1x128xf32>,
    %161 = vector.extract_strided_slice %2 {offsets = [7, 3], sizes = [1, 128], strides = [1, 1]} : vector<8x256xf32> to vector<1x128xf32>
    %c3_162 = arith.constant 3 : index
    %c0_163 = arith.constant 0 : index
    %162 = vector.load %arg7[%c3_162, %c0_163] : memref<16x128xf32, #tpu.memory_space<vmem>>, vector<1x128xf32>
    tpu.vector_store %arg7[%c3_162, %c0_163], %161 {strides = array<i32>} : memref<16x128xf32, #tpu.memory_space<vmem>>, vector<1x128xf32>,
    %163 = vector.extract_strided_slice %2 {offsets = [7, 4], sizes = [1, 128], strides = [1, 1]} : vector<8x256xf32> to vector<1x128xf32>
    %c4_164 = arith.constant 4 : index
    %c0_165 = arith.constant 0 : index
    %164 = vector.load %arg7[%c4_164, %c0_165] : memref<16x128xf32, #tpu.memory_space<vmem>>, vector<1x128xf32>
    tpu.vector_store %arg7[%c4_164, %c0_165], %163 {strides = array<i32>} : memref<16x128xf32, #tpu.memory_space<vmem>>, vector<1x128xf32>,
    %165 = vector.extract_strided_slice %2 {offsets = [7, 5], sizes = [1, 128], strides = [1, 1]} : vector<8x256xf32> to vector<1x128xf32>
    %c5_166 = arith.constant 5 : index
    %c0_167 = arith.constant 0 : index
    %166 = vector.load %arg7[%c5_166, %c0_167] : memref<16x128xf32, #tpu.memory_space<vmem>>, vector<1x128xf32>
    tpu.vector_store %arg7[%c5_166, %c0_167], %165 {strides = array<i32>} : memref<16x128xf32, #tpu.memory_space<vmem>>, vector<1x128xf32>,
    %167 = vector.extract_strided_slice %2 {offsets = [7, 6], sizes = [1, 128], strides = [1, 1]} : vector<8x256xf32> to vector<1x128xf32>
    %c6_168 = arith.constant 6 : index
    %c0_169 = arith.constant 0 : index
    %168 = vector.load %arg7[%c6_168, %c0_169] : memref<16x128xf32, #tpu.memory_space<vmem>>, vector<1x128xf32>
    tpu.vector_store %arg7[%c6_168, %c0_169], %167 {strides = array<i32>} : memref<16x128xf32, #tpu.memory_space<vmem>>, vector<1x128xf32>,
    %169 = vector.extract_strided_slice %2 {offsets = [7, 7], sizes = [1, 128], strides = [1, 1]} : vector<8x256xf32> to vector<1x128xf32>
    %c7_170 = arith.constant 7 : index
    %c0_171 = arith.constant 0 : index
    %170 = vector.load %arg7[%c7_170, %c0_171] : memref<16x128xf32, #tpu.memory_space<vmem>>, vector<1x128xf32>
    tpu.vector_store %arg7[%c7_170, %c0_171], %169 {strides = array<i32>} : memref<16x128xf32, #tpu.memory_space<vmem>>, vector<1x128xf32>,
    %c0_172 = arith.constant 0 : index
    %c0_173 = arith.constant 0 : index
    %171 = vector.load %arg7[%c0_172, %c0_173] : memref<16x128xf32, #tpu.memory_space<vmem>>, vector<16x128xf32>
    %cst_174 = arith.constant dense<0.000000e+00> : vector<16x128xf32>
    %172 = tpu.matmul %3, %171, %cst_174 {dimension_numbers = #tpu.dot_dimension_numbers<[1], [0], [0], [1], [0, 0, 1, 1], [], []>} : vector<16x16xf32>, vector<16x128xf32>, vector<16x128xf32> -> vector<16x128xf32>
    %c7_175 = arith.constant 7 : index
    %c0_176 = arith.constant 0 : index
    %c0_177 = arith.constant 0 : index
    %173 = vector.load %arg6[%c7_175, %c0_176, %c0_177] : memref<8x16x128xf32, #tpu.memory_space<vmem>>, vector<1x16x128xf32>
    %174 = vector.shape_cast %173 : vector<1x16x128xf32> to vector<16x128xf32>
    %175 = vector.shape_cast %172 : vector<16x128xf32> to vector<1x16x128xf32>
    tpu.vector_store %arg6[%c7_175, %c0_176, %c0_177], %175 {strides = array<i32>} : memref<8x16x128xf32, #tpu.memory_space<vmem>>, vector<1x16x128xf32>,
    return
  }
  func.func @transform_0(%arg0: i32, %arg1: i32) -> (i32, i32) {
    %c0_i32 = arith.constant 0 : i32
    return %arg0, %arg1 : i32, i32
  }
  func.func @transform_1(%arg0: i32, %arg1: i32) -> (i32, i32) {
    %c1_i32 = arith.constant 1 : i32
    %0 = arith.addi %arg1, %c1_i32 : i32
    %c1_i32_0 = arith.constant 1 : i32
    %1 = arith.muli %0, %c1_i32_0 : i32
    %c0_i32 = arith.constant 0 : i32
    return %arg0, %1 : i32, i32
  }
  func.func @transform_2(%arg0: i32, %arg1: i32) -> (i32, i32) {
    %c0_i32 = arith.constant 0 : i32
    %c0_i32_0 = arith.constant 0 : i32
    %c0_i32_1 = arith.constant 0 : i32
    return %c0_i32, %c0_i32_0 : i32, i32
  }
  func.func @transform_3(%arg0: i32, %arg1: i32) -> (i32, i32) {
    %c0_i32 = arith.constant 0 : i32
    %c0_i32_0 = arith.constant 0 : i32
    return %c0_i32, %arg1 : i32, i32
  }
  func.func @transform_4(%arg0: i32, %arg1: i32) -> (i32, i32, i32) {
    %c0_i32 = arith.constant 0 : i32
    %c0_i32_0 = arith.constant 0 : i32
    return %arg0, %c0_i32, %arg1 : i32, i32, i32
  }
}

</mosaic_0001>

<llo_original>
// kernel: gabor_conv1d.1
$region0: #{gabor_conv1d.1}
  #allocation0 [shape = 'u32[]', space=smem, size = 0x4, offset = 0x4, fixed_abs, tag = 'smem constant byte address 0x4 - core index']
  #allocation1 [shape = 'u32[72,128]{1,0:T(1,128)}', space=vmem, size = 0x9000, scoped, tag = 'internal scratch']
  #allocation2 [shape = 'f32[16,128]{1,0:T(8,128)}', space=vmem, size = 0x2000, scoped, tag = 'scratch operand']
  %s0 = inlined_call_operand.vmem [shape: f32[8,256], index: 0, kind: input, shape index: {}, may-alias: {0,1}]
  %s1 = inlined_call_operand.vmem [shape: f32[8,256], index: 1, kind: input, shape index: {}, may-alias: {0,1}]
  %s2 = inlined_call_operand.vmem [shape: f32[16,16], index: 2, kind: input, shape index: {}]
  %s3 = inlined_call_operand.vmem [shape: f32[1,128], index: 3, kind: input, shape index: {}]
  %s4 = inlined_call_operand.vmem [shape: f32[8,16,128], index: 4, kind: output, shape index: {}]
  %s5 = sld [smem:[#allocation0]]
  $region26: #{gabor_conv1d.1} parent=0
    _
  %s7 = ssub.s32 1, %s5
  %s8 = scalar_select 0, %s7, %s5
  // Predicated region
  $region2: #{gabor_conv1d.1} parent=0 // pred_check
    _
  $region3: #{gabor_conv1d.1} parent=0 // pred_check_branch
    %10 = sbr.rel (0) target = $region5
  $region4: #{gabor_conv1d.1} parent=0 // pred_region
    _
  $region5: #{gabor_conv1d.1} parent=0 // pred_fallthru
    _
  // Predicated region
  $region6: #{gabor_conv1d.1} parent=0 // pred_check
    _
  $region7: #{gabor_conv1d.1} parent=0 // pred_check_branch
    %12 = sbr.rel (0) target = $region9
  $region8: #{gabor_conv1d.1} parent=0 // pred_region
    %s13 = sadd.s32 0, 1
    %p14 = scmp.lt.s32.totalorder %s13, 1
    %s15 = scalar_select %p14, %s13, 1
    %s16 = smul.addr %s15, 8
    %s17 = scalar_lea.vmem %s1, %s16
    %s18 = sadd.s32 0, 1
  $region9: #{gabor_conv1d.1} parent=0 // pred_fallthru
    _
  // Predicated region
  $region10: #{gabor_conv1d.1} parent=0 // pred_check
    _
  $region11: #{gabor_conv1d.1} parent=0 // pred_check_branch
    %20 = sbr.rel (0) target = $region13
  $region12: #{gabor_conv1d.1} parent=0 // pred_region
    _
  $region13: #{gabor_conv1d.1} parent=0 // pred_fallthru
    _
  // Predicated region
  $region14: #{gabor_conv1d.1} parent=0 // pred_check
    _
  $region15: #{gabor_conv1d.1} parent=0 // pred_check_branch
    %22 = sbr.rel (0) target = $region17
  $region16: #{gabor_conv1d.1} parent=0 // pred_region
    _
  $region17: #{gabor_conv1d.1} parent=0 // pred_fallthru
    _
  %s23 = sadd.s32 0, 1
  %p24 = scmp.lt.s32.totalorder %s23, 1
  %s25 = scalar_select %p24, %s23, 1
  %s26 = smul.addr %s25, 8
  %s27 = scalar_lea.vmem %s1, %s26
  %s28 = sadd.s32 0, 1
  %p29 = scmp.lt.s32.totalorder %s28, 1
  %s30 = scalar_select %p29, %s28, 1
  %s31 = smul.addr %s30, 8
  %s32 = scalar_lea.vmem %s1, %s31
  %s33 = sadd.s32 0, 1
  %v34 = vld [vmem:[%s0] sm:$0xff]
  %v35 = vld [vmem:[%s32] sm:$0xff]
  %v36 = vld [vmem:[%s2] sm:$0xff]
  %v37 = vld [vmem:[%s2 + $0x8] sm:$0xff]
  %v38 = vld [vmem:[%s3] sm:$0x1]
  %39 = vst [vmem:[#allocation2 + $0x8] sm:$0x1] %v38
  %40 = vst [vmem:[#allocation2 + $0x9] sm:$0x7f] 0.0
  %41 = vst [vmem:[#allocation2] sm:$0x1] %v34
  %44 = vrot.lane.b32.xlu0 %v34, 127
  %v45 = vpop.permute.xlu0 %44
  %46 = vrot.lane.b32.xlu0 %v35, 127
  %v47 = vpop.permute.xlu0 %46
  %vm48 = vcmask 1039360
  %v49 = vsel %vm48, %v45, %v47
  %51 = vst [vmem:[#allocation2 + $0x1] sm:$0x1] %v49
  %52 = vrot.lane.b32.xlu0 %v34, 126
  %v53 = vpop.permute.xlu0 %52
  %54 = vrot.lane.b32.xlu0 %v35, 126
  %v55 = vpop.permute.xlu0 %54
  %vm56 = vcmask 1031168
  %v57 = vsel %vm56, %v53, %v55
  %59 = vst [vmem:[#allocation2 + $0x2] sm:$0x1] %v57
  %60 = vrot.lane.b32.xlu0 %v34, 125
  %v61 = vpop.permute.xlu0 %60
  %62 = vrot.lane.b32.xlu0 %v35, 125
  %v63 = vpop.permute.xlu0 %62
  %vm64 = vcmask 1022976
  %v65 = vsel %vm64, %v61, %v63
  %67 = vst [vmem:[#allocation2 + $0x3] sm:$0x1] %v65
  %68 = vrot.lane.b32.xlu0 %v34, 124
  %v69 = vpop.permute.xlu0 %68
  %70 = vrot.lane.b32.xlu0 %v35, 124
  %v71 = vpop.permute.xlu0 %70
  %vm72 = vcmask 1014784
  %v73 = vsel %vm72, %v69, %v71
  %75 = vst [vmem:[#allocation2 + $0x4] sm:$0x1] %v73
  %76 = vrot.lane.b32.xlu0 %v34, 123
  %v77 = vpop.permute.xlu0 %76
  %78 = vrot.lane.b32.xlu0 %v35, 123
  %v79 = vpop.permute.xlu0 %78
  %vm80 = vcmask 1006592
  %v81 = vsel %vm80, %v77, %v79
  %83 = vst [vmem:[#allocation2 + $0x5] sm:$0x1] %v81
  %84 = vrot.lane.b32.xlu0 %v34, 122
  %v85 = vpop.permute.xlu0 %84
  %86 = vrot.lane.b32.xlu0 %v35, 122
  %v87 = vpop.permute.xlu0 %86
  %vm88 = vcmask 998400
  %v89 = vsel %vm88, %v85, %v87
  %91 = vst [vmem:[#allocation2 + $0x6] sm:$0x1] %v89
  %92 = vrot.lane.b32.xlu0 %v34, 121
  %v93 = vpop.permute.xlu0 %92
  %94 = vrot.lane.b32.xlu0 %v35, 121
  %v95 = vpop.permute.xlu0 %94
  %vm96 = vcmask 990208
  %v97 = vsel %vm96, %v93, %v95
  %99 = vst [vmem:[#allocation2 + $0x7] sm:$0x1] %v97
  %v100 = vld [vmem:[#allocation2] sm:$0xff]
  %v101 = vld [vmem:[#allocation2 + $0x8] sm:$0xff]
  %vm102 = vcmask 130048
  %v104 = vsel %vm102, %v36, 0
  %v107 = vsel %vm102, %v37, 0
  %109 = vmatpush.msra.mxu0 0.0
  %110 = vmatpush.msra.mxu0 0.0
  %111 = vmatpush.msra.mxu0 0.0
  %112 = vmatpush.msra.mxu0 0.0
  %113 = vmatpush.msra.mxu0 0.0
  %114 = vmatpush.msra.mxu0 0.0
  %115 = vmatpush.msra.mxu0 0.0
  %116 = vmatpush.msra.mxu0 0.0
  %117 = vmatpush.msra.mxu0 0.0
  %118 = vmatpush.msra.mxu0 0.0
  %119 = vmatpush.msra.mxu0 0.0
  %120 = vmatpush.msra.mxu0 0.0
  %121 = vmatpush.msra.mxu0 0.0
  %122 = vmatpush.msra.mxu0 0.0
  %123 = vmatpush.msra.mxu0 %v101
  %124 = vmatpush.msra.mxu0 %v100
  %125 = vmatmul.f32.gmra.mxu0 %v104
  %v126 = vpop.f32.mrf.mxu0
  %v127 = vadd.f32 0.0, %v126
  %128 = vmatmul.f32.gmra.mxu0 %v107
  %v129 = vpop.f32.mrf.mxu0
  %v130 = vadd.f32 0.0, %v129
  %131 = vdwg.mxu0
  %132 = vst [vmem:[%s4] sm:$0xff] %v127
  %133 = vst [vmem:[%s4 + $0x8] sm:$0xff] %v130
  %134 = vst [vmem:[#allocation2 - $0x1] sm:$0x2] %v34
  %135 = vst [vmem:[#allocation2] sm:$0x2] %v49
  %136 = vst [vmem:[#allocation2 + $0x1] sm:$0x2] %v57
  %137 = vst [vmem:[#allocation2 + $0x2] sm:$0x2] %v65
  %138 = vst [vmem:[#allocation2 + $0x3] sm:$0x2] %v73
  %139 = vst [vmem:[#allocation2 + $0x4] sm:$0x2] %v81
  %140 = vst [vmem:[#allocation2 + $0x5] sm:$0x2] %v89
  %141 = vst [vmem:[#allocation2 + $0x6] sm:$0x2] %v97
  %v142 = vld [vmem:[#allocation2] sm:$0xff]
  %v143 = vld [vmem:[#allocation2 + $0x8] sm:$0xff]
  %144 = vmatpush.msra.mxu0 0.0
  %145 = vmatpush.msra.mxu0 0.0
  %146 = vmatpush.msra.mxu0 0.0
  %147 = vmatpush.msra.mxu0 0.0
  %148 = vmatpush.msra.mxu0 0.0
  %149 = vmatpush.msra.mxu0 0.0
  %150 = vmatpush.msra.mxu0 0.0
  %151 = vmatpush.msra.mxu0 0.0
  %152 = vmatpush.msra.mxu0 0.0
  %153 = vmatpush.msra.mxu0 0.0
  %154 = vmatpush.msra.mxu0 0.0
  %155 = vmatpush.msra.mxu0 0.0
  %156 = vmatpush.msra.mxu0 0.0
  %157 = vmatpush.msra.mxu0 0.0
  %158 = vmatpush.msra.mxu0 %v143
  %159 = vmatpush.msra.mxu0 %v142
  %160 = vmatmul.f32.gmra.mxu0 %v104
  %v161 = vpop.f32.mrf.mxu0
  %v162 = vadd.f32 0.0, %v161
  %163 = vmatmul.f32.gmra.mxu0 %v107
  %v164 = vpop.f32.mrf.mxu0
  %v165 = vadd.f32 0.0, %v164
  %166 = vdwg.mxu0
  %s167 = scalar_lea.vmem %s4, 16
  %168 = vst [vmem:[%s167] sm:$0xff] %v162
  %169 = vst [vmem:[%s167 + $0x8] sm:$0xff] %v165
  %170 = vst [vmem:[#allocation2 - $0x2] sm:$0x4] %v34
  %171 = vst [vmem:[#allocation2 - $0x1] sm:$0x4] %v49
  %172 = vst [vmem:[#allocation2] sm:$0x4] %v57
  %173 = vst [vmem:[#allocation2 + $0x1] sm:$0x4] %v65
  %174 = vst [vmem:[#allocation2 + $0x2] sm:$0x4] %v73
  %175 = vst [vmem:[#allocation2 + $0x3] sm:$0x4] %v81
  %176 = vst [vmem:[#allocation2 + $0x4] sm:$0x4] %v89
  %177 = vst [vmem:[#allocation2 + $0x5] sm:$0x4] %v97
  %v178 = vld [vmem:[#allocation2] sm:$0xff]
  %v179 = vld [vmem:[#allocation2 + $0x8] sm:$0xff]
  %180 = vmatpush.msra.mxu0 0.0
  %181 = vmatpush.msra.mxu0 0.0
  %182 = vmatpush.msra.mxu0 0.0
  %183 = vmatpush.msra.mxu0 0.0
  %184 = vmatpush.msra.mxu0 0.0
  %185 = vmatpush.msra.mxu0 0.0
  %186 = vmatpush.msra.mxu0 0.0
  %187 = vmatpush.msra.mxu0 0.0
  %188 = vmatpush.msra.mxu0 0.0
  %189 = vmatpush.msra.mxu0 0.0
  %190 = vmatpush.msra.mxu0 0.0
  %191 = vmatpush.msra.mxu0 0.0
  %192 = vmatpush.msra.mxu0 0.0
  %193 = vmatpush.msra.mxu0 0.0
  %194 = vmatpush.msra.mxu0 %v179
  %195 = vmatpush.msra.mxu0 %v178
  %196 = vmatmul.f32.gmra.mxu0 %v104
  %v197 = vpop.f32.mrf.mxu0
  %v198 = vadd.f32 0.0, %v197
  %199 = vmatmul.f32.gmra.mxu0 %v107
  %v200 = vpop.f32.mrf.mxu0
  %v201 = vadd.f32 0.0, %v200
  %202 = vdwg.mxu0
  %s203 = scalar_lea.vmem %s4, 32
  %204 = vst [vmem:[%s203] sm:$0xff] %v198
  %205 = vst [vmem:[%s203 + $0x8] sm:$0xff] %v201
  %206 = vst [vmem:[#allocation2 - $0x3] sm:$0x8] %v34
  %207 = vst [vmem:[#allocation2 - $0x2] sm:$0x8] %v49
  %208 = vst [vmem:[#allocation2 - $0x1] sm:$0x8] %v57
  %209 = vst [vmem:[#allocation2] sm:$0x8] %v65
  %210 = vst [vmem:[#allocation2 + $0x1] sm:$0x8] %v73
  %211 = vst [vmem:[#allocation2 + $0x2] sm:$0x8] %v81
  %212 = vst [vmem:[#allocation2 + $0x3] sm:$0x8] %v89
  %213 = vst [vmem:[#allocation2 + $0x4] sm:$0x8] %v97
  %v214 = vld [vmem:[#allocation2] sm:$0xff]
  %v215 = vld [vmem:[#allocation2 + $0x8] sm:$0xff]
  %216 = vmatpush.msra.mxu0 0.0
  %217 = vmatpush.msra.mxu0 0.0
  %218 = vmatpush.msra.mxu0 0.0
  %219 = vmatpush.msra.mxu0 0.0
  %220 = vmatpush.msra.mxu0 0.0
  %221 = vmatpush.msra.mxu0 0.0
  %222 = vmatpush.msra.mxu0 0.0
  %223 = vmatpush.msra.mxu0 0.0
  %224 = vmatpush.msra.mxu0 0.0
  %225 = vmatpush.msra.mxu0 0.0
  %226 = vmatpush.msra.mxu0 0.0
  %227 = vmatpush.msra.mxu0 0.0
  %228 = vmatpush.msra.mxu0 0.0
  %229 = vmatpush.msra.mxu0 0.0
  %230 = vmatpush.msra.mxu0 %v215
  %231 = vmatpush.msra.mxu0 %v214
  %232 = vmatmul.f32.gmra.mxu0 %v104
  %v233 = vpop.f32.mrf.mxu0
  %v234 = vadd.f32 0.0, %v233
  %235 = vmatmul.f32.gmra.mxu0 %v107
  %v236 = vpop.f32.mrf.mxu0
  %v237 = vadd.f32 0.0, %v236
  %238 = vdwg.mxu0
  %s239 = scalar_lea.vmem %s4, 48
  %240 = vst [vmem:[%s239] sm:$0xff] %v234
  %241 = vst [vmem:[%s239 + $0x8] sm:$0xff] %v237
  %242 = vst [vmem:[#allocation2 - $0x4] sm:$0x10] %v34
  %243 = vst [vmem:[#allocation2 - $0x3] sm:$0x10] %v49
  %244 = vst [vmem:[#allocation2 - $0x2] sm:$0x10] %v57
  %245 = vst [vmem:[#allocation2 - $0x1] sm:$0x10] %v65
  %246 = vst [vmem:[#allocation2] sm:$0x10] %v73
  %247 = vst [vmem:[#allocation2 + $0x1] sm:$0x10] %v81
  %248 = vst [vmem:[#allocation2 + $0x2] sm:$0x10] %v89
  %249 = vst [vmem:[#allocation2 + $0x3] sm:$0x10] %v97
  %v250 = vld [vmem:[#allocation2] sm:$0xff]
  %v251 = vld [vmem:[#allocation2 + $0x8] sm:$0xff]
  %252 = vmatpush.msra.mxu0 0.0
  %253 = vmatpush.msra.mxu0 0.0
  %254 = vmatpush.msra.mxu0 0.0
  %255 = vmatpush.msra.mxu0 0.0
  %256 = vmatpush.msra.mxu0 0.0
  %257 = vmatpush.msra.mxu0 0.0
  %258 = vmatpush.msra.mxu0 0.0
  %259 = vmatpush.msra.mxu0 0.0
  %260 = vmatpush.msra.mxu0 0.0
  %261 = vmatpush.msra.mxu0 0.0
  %262 = vmatpush.msra.mxu0 0.0
  %263 = vmatpush.msra.mxu0 0.0
  %264 = vmatpush.msra.mxu0 0.0
  %265 = vmatpush.msra.mxu0 0.0
  %266 = vmatpush.msra.mxu0 %v251
  %267 = vmatpush.msra.mxu0 %v250
  %268 = vmatmul.f32.gmra.mxu0 %v104
  %v269 = vpop.f32.mrf.mxu0
  %v270 = vadd.f32 0.0, %v269
  %271 = vmatmul.f32.gmra.mxu0 %v107
  %v272 = vpop.f32.mrf.mxu0
  %v273 = vadd.f32 0.0, %v272
  %274 = vdwg.mxu0
  %s275 = scalar_lea.vmem %s4, 64
  %276 = vst [vmem:[%s275] sm:$0xff] %v270
  %277 = vst [vmem:[%s275 + $0x8] sm:$0xff] %v273
  %278 = vst [vmem:[#allocation2 - $0x5] sm:$0x20] %v34
  %279 = vst [vmem:[#allocation2 - $0x4] sm:$0x20] %v49
  %280 = vst [vmem:[#allocation2 - $0x3] sm:$0x20] %v57
  %281 = vst [vmem:[#allocation2 - $0x2] sm:$0x20] %v65
  %282 = vst [vmem:[#allocation2 - $0x1] sm:$0x20] %v73
  %283 = vst [vmem:[#allocation2] sm:$0x20] %v81
  %284 = vst [vmem:[#allocation2 + $0x1] sm:$0x20] %v89
  %285 = vst [vmem:[#allocation2 + $0x2] sm:$0x20] %v97
  %v286 = vld [vmem:[#allocation2] sm:$0xff]
  %v287 = vld [vmem:[#allocation2 + $0x8] sm:$0xff]
  %288 = vmatpush.msra.mxu0 0.0
  %289 = vmatpush.msra.mxu0 0.0
  %290 = vmatpush.msra.mxu0 0.0
  %291 = vmatpush.msra.mxu0 0.0
  %292 = vmatpush.msra.mxu0 0.0
  %293 = vmatpush.msra.mxu0 0.0
  %294 = vmatpush.msra.mxu0 0.0
  %295 = vmatpush.msra.mxu0 0.0
  %296 = vmatpush.msra.mxu0 0.0
  %297 = vmatpush.msra.mxu0 0.0
  %298 = vmatpush.msra.mxu0 0.0
  %299 = vmatpush.msra.mxu0 0.0
  %300 = vmatpush.msra.mxu0 0.0
  %301 = vmatpush.msra.mxu0 0.0
  %302 = vmatpush.msra.mxu0 %v287
  %303 = vmatpush.msra.mxu0 %v286
  %304 = vmatmul.f32.gmra.mxu0 %v104
  %v305 = vpop.f32.mrf.mxu0
  %v306 = vadd.f32 0.0, %v305
  %307 = vmatmul.f32.gmra.mxu0 %v107
  %v308 = vpop.f32.mrf.mxu0
  %v309 = vadd.f32 0.0, %v308
  %310 = vdwg.mxu0
  %s311 = scalar_lea.vmem %s4, 80
  %312 = vst [vmem:[%s311] sm:$0xff] %v306
  %313 = vst [vmem:[%s311 + $0x8] sm:$0xff] %v309
  %314 = vst [vmem:[#allocation2 - $0x6] sm:$0x40] %v34
  %315 = vst [vmem:[#allocation2 - $0x5] sm:$0x40] %v49
  %316 = vst [vmem:[#allocation2 - $0x4] sm:$0x40] %v57
  %317 = vst [vmem:[#allocation2 - $0x3] sm:$0x40] %v65
  %318 = vst [vmem:[#allocation2 - $0x2] sm:$0x40] %v73
  %319 = vst [vmem:[#allocation2 - $0x1] sm:$0x40] %v81
  %320 = vst [vmem:[#allocation2] sm:$0x40] %v89
  %321 = vst [vmem:[#allocation2 + $0x1] sm:$0x40] %v97
  %v322 = vld [vmem:[#allocation2] sm:$0xff]
  %v323 = vld [vmem:[#allocation2 + $0x8] sm:$0xff]
  %324 = vmatpush.msra.mxu0 0.0
  %325 = vmatpush.msra.mxu0 0.0
  %326 = vmatpush.msra.mxu0 0.0
  %327 = vmatpush.msra.mxu0 0.0
  %328 = vmatpush.msra.mxu0 0.0
  %329 = vmatpush.msra.mxu0 0.0
  %330 = vmatpush.msra.mxu0 0.0
  %331 = vmatpush.msra.mxu0 0.0
  %332 = vmatpush.msra.mxu0 0.0
  %333 = vmatpush.msra.mxu0 0.0
  %334 = vmatpush.msra.mxu0 0.0
  %335 = vmatpush.msra.mxu0 0.0
  %336 = vmatpush.msra.mxu0 0.0
  %337 = vmatpush.msra.mxu0 0.0
  %338 = vmatpush.msra.mxu0 %v323
  %339 = vmatpush.msra.mxu0 %v322
  %340 = vmatmul.f32.gmra.mxu0 %v104
  %v341 = vpop.f32.mrf.mxu0
  %v342 = vadd.f32 0.0, %v341
  %343 = vmatmul.f32.gmra.mxu0 %v107
  %v344 = vpop.f32.mrf.mxu0
  %v345 = vadd.f32 0.0, %v344
  %346 = vdwg.mxu0
  %s347 = scalar_lea.vmem %s4, 96
  %348 = vst [vmem:[%s347] sm:$0xff] %v342
  %349 = vst [vmem:[%s347 + $0x8] sm:$0xff] %v345
  %350 = vst [vmem:[#allocation2 - $0x7] sm:$0x80] %v34
  %351 = vst [vmem:[#allocation2 - $0x6] sm:$0x80] %v49
  %352 = vst [vmem:[#allocation2 - $0x5] sm:$0x80] %v57
  %353 = vst [vmem:[#allocation2 - $0x4] sm:$0x80] %v65
  %354 = vst [vmem:[#allocation2 - $0x3] sm:$0x80] %v73
  %355 = vst [vmem:[#allocation2 - $0x2] sm:$0x80] %v81
  %356 = vst [vmem:[#allocation2 - $0x1] sm:$0x80] %v89
  %357 = vst [vmem:[#allocation2] sm:$0x80] %v97
  %v358 = vld [vmem:[#allocation2] sm:$0xff]
  %v359 = vld [vmem:[#allocation2 + $0x8] sm:$0xff]
  %360 = vmatpush.msra.mxu0 0.0
  %361 = vmatpush.msra.mxu0 0.0
  %362 = vmatpush.msra.mxu0 0.0
  %363 = vmatpush.msra.mxu0 0.0
  %364 = vmatpush.msra.mxu0 0.0
  %365 = vmatpush.msra.mxu0 0.0
  %366 = vmatpush.msra.mxu0 0.0
  %367 = vmatpush.msra.mxu0 0.0
  %368 = vmatpush.msra.mxu0 0.0
  %369 = vmatpush.msra.mxu0 0.0
  %370 = vmatpush.msra.mxu0 0.0
  %371 = vmatpush.msra.mxu0 0.0
  %372 = vmatpush.msra.mxu0 0.0
  %373 = vmatpush.msra.mxu0 0.0
  %374 = vmatpush.msra.mxu0 %v359
  %375 = vmatpush.msra.mxu0 %v358
  %376 = vmatmul.f32.gmra.mxu0 %v104
  %v377 = vpop.f32.mrf.mxu0
  %v378 = vadd.f32 0.0, %v377
  %379 = vmatmul.f32.gmra.mxu0 %v107
  %v380 = vpop.f32.mrf.mxu0
  %v381 = vadd.f32 0.0, %v380
  %382 = vdwg.mxu0
  %s383 = scalar_lea.vmem %s4, 112
  %384 = vst [vmem:[%s383] sm:$0xff] %v378
  %385 = vst [vmem:[%s383 + $0x8] sm:$0xff] %v381
  // Predicated region
  $region18: #{gabor_conv1d.1} parent=0 // pred_check
    _
  $region19: #{gabor_conv1d.1} parent=0 // pred_check_branch
    %387 = sbr.rel (0) target = $region21
  $region20: #{gabor_conv1d.1} parent=0 // pred_region
    _
  $region21: #{gabor_conv1d.1} parent=0 // pred_fallthru
    _
  // Predicated region
  $region22: #{gabor_conv1d.1} parent=0 // pred_check
    _
  $region23: #{gabor_conv1d.1} parent=0 // pred_check_branch
    %389 = sbr.rel (0) target = $region25
  $region24: #{gabor_conv1d.1} parent=0 // pred_region
    _
  $region25: #{gabor_conv1d.1} parent=0 // pred_fallthru
    _

</llo_original>
